<compile_context>
chip_gen: v6e
topology: v6e:2x2x1
jax: 0.10.0
libtpu: 0.0.40
codegen_flags: <defaults>
</compile_context>

<pallas_src>
import jax
import jax.numpy as jnp
from jax.experimental import pallas as pl
from jax.experimental.pallas import tpu as pltpu


def mlp_kernel(x_ref, w1_ref, b1_ref, w2_ref, b2_ref, o_ref):
    # Hidden layer: f32 x @ f32 W1 on the MXU, f32 accumulate; bias + ReLU on the VPU.
    h = jnp.dot(x_ref[...], w1_ref[...], preferred_element_type=jnp.float32)
    h = jnp.maximum(h + b1_ref[...], 0.0)
    # Output layer: tiny (8 -> 2) matmul, f32; fully hidden under the x DMA stream.
    out = jnp.dot(h, w2_ref[...], preferred_element_type=jnp.float32) + b2_ref[...]
    o_ref[...] = out.astype(o_ref.dtype)


def _round_up(v, m):
    return ((v + m - 1) // m) * m


def _vmem_budget_bytes():
    """Generation-aware scoped-VMEM budget: half of physical VMEM, capped at 32 MiB.
    (v5e/v6e: 128 MiB physical -> 32 MiB; v7x: 64 MiB physical -> 32 MiB.)"""
    try:
        phys = int(pltpu.get_tpu_info().vmem_capacity_bytes)
    except Exception:
        phys = 64 << 20  # conservative (v7x) fallback
    return min(32 << 20, phys // 2)


def _pick_tile_b(batch, d, out_d, x_itemsize, out_itemsize, vmem_budget_bytes):
    """Largest batch tile whose double-buffered x AND output blocks fit the VMEM budget.

    VMEM footprint accounts for last-dim padding to the 128-lane vreg width
    (a (tile_b, 32) f32 block really occupies tile_b * 128 * 4 bytes)."""
    headroom = 2 << 20  # resident weights/biases + pipeline bookkeeping + slack
    usable = max(1 << 20, vmem_budget_bytes - headroom)

    d_pad = _round_up(max(d, 1), 128)
    o_pad = _round_up(max(out_d, 1), 128)
    # 2x double-buffered x block + 2x double-buffered output block, per row.
    per_row = 2 * (d_pad * x_itemsize + o_pad * out_itemsize)

    tb = usable // per_row
    padded_b = _round_up(max(batch, 1), 8)
    tb = min(tb, padded_b)

    # Megacore (v7x, 2 TCs sharing the "parallel" batch axis): keep >= 4 grid steps
    # when the batch is big enough so neither core idles. No-op for huge batches
    # (VMEM cap already forces many steps) and for tiny ones.
    if padded_b >= 4 * 1024:
        target = _round_up(-(-padded_b // 4), 8)
        tb = min(tb, target)

    return max(8, (tb // 8) * 8)


def meta_learner_forward(x, w1, b1, w2, b2, *, tile_b=None):
    """x: (B, D) f32. w1: (D, 8) pre-transposed, b1: (1, 8), w2: (8, 2), b2: (1, 2).
    Returns (B, 2) f32 -- same math as Linear(D,8) -> ReLU -> Linear(8,2)."""
    B, D = x.shape
    H = w1.shape[1]
    O = w2.shape[1]

    x = x.astype(jnp.float32)
    w1 = w1.astype(jnp.float32)

    vmem_budget = _vmem_budget_bytes()
    if tile_b is None:
        tile_b = _pick_tile_b(B, D, O, x.dtype.itemsize, 4, vmem_budget)
    grid = (pl.cdiv(B, tile_b),)

    cost = pl.CostEstimate(
        flops=2 * B * D * H + 2 * B * H * O,
        transcendentals=0,
        bytes_accessed=(B * D * 4 + B * O * 4          # x stream in, y stream out
                        + D * H * 4 + H * 4 + H * O * 4 + O * 4),  # resident params
    )

    return pl.pallas_call(
        mlp_kernel,
        out_shape=jax.ShapeDtypeStruct((B, O), jnp.float32),
        grid=grid,
        in_specs=[
            pl.BlockSpec((tile_b, D), lambda i: (i, 0)),  # x: streamed over batch
            pl.BlockSpec((D, H), lambda i: (0, 0)),       # w1: resident
            pl.BlockSpec((1, H), lambda i: (0, 0)),       # b1: resident
            pl.BlockSpec((H, O), lambda i: (0, 0)),       # w2: resident
            pl.BlockSpec((1, O), lambda i: (0, 0)),       # b2: resident
        ],
        out_specs=pl.BlockSpec((tile_b, O), lambda i: (i, 0)),
        compiler_params=pltpu.CompilerParams(
            # Batch tiles are independent: shards across both TCs on v7x,
            # harmless on single-TC v5e/v6e.
            dimension_semantics=("parallel",),
            # Match the scoped limit to the budget the tile sizing assumed.
            vmem_limit_bytes=vmem_budget,
        ),
        cost_estimate=cost,
    )(x, w1, b1, w2, b2)


def init_params(key, input_size, hidden=8, out=2):
    """Deterministic init matching PyTorch Linear shapes (returned pre-transposed)."""
    k1, k2, k3, k4 = jax.random.split(key, 4)
    # nn.Linear(input_size, 8): W (8, input_size), b (8,) -> stored as (input_size, 8), (1, 8)
    bound1 = 1.0 / (input_size ** 0.5)
    w1 = jax.random.uniform(k1, (input_size, hidden), jnp.float32, -bound1, bound1)
    b1 = jax.random.uniform(k2, (1, hidden), jnp.float32, -bound1, bound1)
    # nn.Linear(8, 2): W (2, 8), b (2,) -> stored as (8, 2), (1, 2)
    bound2 = 1.0 / (hidden ** 0.5)
    w2 = jax.random.uniform(k3, (hidden, out), jnp.float32, -bound2, bound2)
    b2 = jax.random.uniform(k4, (1, out), jnp.float32, -bound2, bound2)
    return w1, b1, w2, b2


if __name__ == "__main__":
    key = jax.random.PRNGKey(0)
    kx, kp = jax.random.split(key)

    # Small but multi-tile: tile_b=128 over batch=300 -> 3 grid steps incl. a ragged
    # last tile, exercising the pipelined DMA path and masked output writeback.
    batch, input_size = 300, 32
    x = jax.random.normal(kx, (batch, input_size), jnp.float32)
    w1, b1, w2, b2 = init_params(kp, input_size)

    out = meta_learner_forward(x, w1, b1, w2, b2, tile_b=128)
    out = jax.block_until_ready(out)

    # Also run once with the auto-picked (large-tile) path to make sure sizing is valid.
    out_auto = jax.block_until_ready(meta_learner_forward(x, w1, b1, w2, b2))

    # Plain-JAX f32 reference (same precision path as the PyTorch module).
    ref = jnp.maximum(x @ w1 + b1, 0.0) @ w2 + b2
    assert out.shape == (batch, 2)
    assert jnp.allclose(out, ref, atol=1e-4, rtol=1e-4)
    assert jnp.allclose(out_auto, ref, atol=1e-4, rtol=1e-4)

    print("KERNEL_OK")
</pallas_src>

<mosaic_0001>
module attributes {stable_mosaic.version = 11 : i64} {
  func.func @mlp_kernel(%arg0: i32, %arg1: memref<128x32xf32, #tpu.memory_space<vmem>>, %arg2: memref<32x8xf32, #tpu.memory_space<vmem>>, %arg3: memref<1x8xf32, #tpu.memory_space<vmem>>, %arg4: memref<8x2xf32, #tpu.memory_space<vmem>>, %arg5: memref<1x2xf32, #tpu.memory_space<vmem>>, %arg6: memref<128x2xf32, #tpu.memory_space<vmem>>) attributes {dimension_semantics = [#tpu.dimension_semantics<parallel>], iteration_bounds = array<i64: 3>, scalar_prefetch = 0 : i64, scratch_operands = 0 : i64, tpu.core_type = #tpu.core_type<tc>, window_params = [{transform_indices = @transform_0, window_bounds = array<i64: 128, 32>}, {pipeline_mode = #tpu.pipeline_mode<synchronous>, transform_indices = @transform_1, window_bounds = array<i64: 32, 8>}, {pipeline_mode = #tpu.pipeline_mode<synchronous>, transform_indices = @transform_2, window_bounds = array<i64: 1, 8>}, {pipeline_mode = #tpu.pipeline_mode<synchronous>, transform_indices = @transform_3, window_bounds = array<i64: 8, 2>}, {pipeline_mode = #tpu.pipeline_mode<synchronous>, transform_indices = @transform_4, window_bounds = array<i64: 1, 2>}, {transform_indices = @transform_5, window_bounds = array<i64: 128, 2>}]} {
    %c0 = arith.constant 0 : index
    %c0_0 = arith.constant 0 : index
    %0 = vector.load %arg1[%c0, %c0_0] : memref<128x32xf32, #tpu.memory_space<vmem>>, vector<128x32xf32>
    %c0_1 = arith.constant 0 : index
    %c0_2 = arith.constant 0 : index
    %1 = vector.load %arg2[%c0_1, %c0_2] : memref<32x8xf32, #tpu.memory_space<vmem>>, vector<32x8xf32>
    %cst = arith.constant dense<0.000000e+00> : vector<128x8xf32>
    %2 = tpu.matmul %0, %1, %cst {dimension_numbers = #tpu.dot_dimension_numbers<[1], [0], [0], [1], [0, 0, 1, 1], [], []>} : vector<128x32xf32>, vector<32x8xf32>, vector<128x8xf32> -> vector<128x8xf32>
    %c0_3 = arith.constant 0 : index
    %c0_4 = arith.constant 0 : index
    %3 = vector.load %arg3[%c0_3, %c0_4] : memref<1x8xf32, #tpu.memory_space<vmem>>, vector<1x8xf32>
    %4 = vector.broadcast %3 : vector<1x8xf32> to vector<128x8xf32>
    %5 = arith.addf %2, %4 : vector<128x8xf32>
    %cst_5 = arith.constant 0.000000e+00 : f32
    %6 = vector.broadcast %cst_5 : f32 to vector<128x8xf32>
    %7 = arith.maximumf %5, %6 : vector<128x8xf32>
    %c0_6 = arith.constant 0 : index
    %c0_7 = arith.constant 0 : index
    %8 = vector.load %arg4[%c0_6, %c0_7] : memref<8x2xf32, #tpu.memory_space<vmem>>, vector<8x2xf32>
    %cst_8 = arith.constant dense<0.000000e+00> : vector<128x2xf32>
    %9 = tpu.matmul %7, %8, %cst_8 {dimension_numbers = #tpu.dot_dimension_numbers<[1], [0], [0], [1], [0, 0, 1, 1], [], []>} : vector<128x8xf32>, vector<8x2xf32>, vector<128x2xf32> -> vector<128x2xf32>
    %c0_9 = arith.constant 0 : index
    %c0_10 = arith.constant 0 : index
    %10 = vector.load %arg5[%c0_9, %c0_10] : memref<1x2xf32, #tpu.memory_space<vmem>>, vector<1x2xf32>
    %11 = vector.broadcast %10 : vector<1x2xf32> to vector<128x2xf32>
    %12 = arith.addf %9, %11 : vector<128x2xf32>
    %c0_11 = arith.constant 0 : index
    %c0_12 = arith.constant 0 : index
    %13 = vector.load %arg6[%c0_11, %c0_12] : memref<128x2xf32, #tpu.memory_space<vmem>>, vector<128x2xf32>
    tpu.vector_store %arg6[%c0_11, %c0_12], %12 {strides = array<i32>} : memref<128x2xf32, #tpu.memory_space<vmem>>, vector<128x2xf32>,
    return
  }
  func.func @transform_0(%arg0: i32) -> (i32, i32) {
    %c0_i32 = arith.constant 0 : i32
    %c0_i32_0 = arith.constant 0 : i32
    return %arg0, %c0_i32 : i32, i32
  }
  func.func @transform_1(%arg0: i32) -> (i32, i32) {
    %c0_i32 = arith.constant 0 : i32
    %c0_i32_0 = arith.constant 0 : i32
    %c0_i32_1 = arith.constant 0 : i32
    return %c0_i32, %c0_i32_0 : i32, i32
  }
  func.func @transform_2(%arg0: i32) -> (i32, i32) {
    %c0_i32 = arith.constant 0 : i32
    %c0_i32_0 = arith.constant 0 : i32
    %c0_i32_1 = arith.constant 0 : i32
    return %c0_i32, %c0_i32_0 : i32, i32
  }
  func.func @transform_3(%arg0: i32) -> (i32, i32) {
    %c0_i32 = arith.constant 0 : i32
    %c0_i32_0 = arith.constant 0 : i32
    %c0_i32_1 = arith.constant 0 : i32
    return %c0_i32, %c0_i32_0 : i32, i32
  }
  func.func @transform_4(%arg0: i32) -> (i32, i32) {
    %c0_i32 = arith.constant 0 : i32
    %c0_i32_0 = arith.constant 0 : i32
    %c0_i32_1 = arith.constant 0 : i32
    return %c0_i32, %c0_i32_0 : i32, i32
  }
  func.func @transform_5(%arg0: i32) -> (i32, i32) {
    %c0_i32 = arith.constant 0 : i32
    %c0_i32_0 = arith.constant 0 : i32
    return %arg0, %c0_i32 : i32, i32
  }
}

</mosaic_0001>

<llo_original>
// kernel: tpu_custom_call.1
$region0: #{tpu_custom_call.1}
  #allocation0 [shape = 'u32[]', space=smem, size = 0x4, offset = 0x4, fixed_abs, tag = 'smem constant byte address 0x4 - core index']
  #allocation1 [shape = 'u32[144,128]{1,0:T(1,128)}', space=vmem, size = 0x12000, scoped, tag = 'internal scratch']
  %s0 = inlined_call_operand.vmem [shape: f32[300,32], index: 0, kind: input, shape index: {}]
  %s1 = inlined_call_operand.vmem [shape: f32[32,8], index: 1, kind: input, shape index: {}]
  %s2 = inlined_call_operand.vmem [shape: f32[1,8], index: 2, kind: input, shape index: {}]
  %s3 = inlined_call_operand.vmem [shape: f32[8,2], index: 3, kind: input, shape index: {}]
  %s4 = inlined_call_operand.vmem [shape: f32[1,2], index: 4, kind: input, shape index: {}]
  %s5 = inlined_call_operand.vmem [shape: f32[300,2], index: 5, kind: output, shape index: {}]
  %s6 = sld [smem:[#allocation0]]
  $region101: #{tpu_custom_call.1} parent=0
    _
  %s8 = ssub.s32 1, %s6
  %s9 = scalar_select 0, %s8, %s6
  $region1: #{tpu_custom_call.1} parent=0
    #allocation2 [shape = 'u8[131072]{0}', space=vmem, size = 0x20000, scoped, tag = 'output window, operand 0']
    loop: start=0, step=1, limit=5
    $region2: #{tpu_custom_call.1} parent=1 // loop_pre_header
      _
    $region3: #{tpu_custom_call.1} parent=1 // loop_header
      %s11 = sphi 0, %s15
      %p12 = scmp.ge.s32.totalorder %s11, 5
      %s21 = sphi 0, %s23
      %s24 = sphi 0, %s21
      %s25 = sphi 0, %s24
      %s41 = sphi 0, %s25
      %s45 = sphi 0, %s45
      %s47 = sphi 0, %s45
      %s48 = sphi 0, %s47
      %s62 = sphi 0, %s48
      %s66 = sphi 0, %s66
      %s68 = sphi 0, %s66
      %s69 = sphi 0, %s68
      %s83 = sphi 0, %s69
      %s87 = sphi 0, %s87
      %s89 = sphi 0, %s87
      %s90 = sphi 0, %s89
      %s104 = sphi 0, %s90
      %s108 = sphi 0, %s108
      %s110 = sphi 0, %s108
      %s111 = sphi 0, %s110
      %s125 = sphi 0, %s111
      %s131 = sphi 0, %s133
      %s134 = sphi 0, %s131
      %s135 = sphi 0, %s134
      %s151 = sphi 0, %s135
    $region4: #{tpu_custom_call.1} parent=1 // loop_header_branch
      %14 = sbr.rel (%p12) target = $region8
    $region5: #{tpu_custom_call.1} parent=1 // loop_body
      %s16 = ssub.s32 %s11, 1
      %s17 = ssub.s32 %s11, 2
      %s18 = sadd.s32 %s11, 1
      %s19 = ssub.s32 %s11, %s18
      %p20 = scmp.eq.s32.totalorder %s19, 0
      %s22 = sadd.s32 %s21, 1
      %s23 = scalar_select %p20, %s21, %s22
      %p26 = pneg %p20
      %p27 = scmp.eq.s32.totalorder %s11, 2
      %p28 = por %p26, %p27
      %p29 = scmp.ne.s32.totalorder %s21, %s24
      %p30 = scmp.eq.s32.totalorder %s11, 0
      %p31 = por %p29, %p30
      %p32 = scmp.ne.s32.totalorder %s21, %s24
      %p33 = scmp.eq.s32.totalorder %s16, 2
      %p34 = por %p32, %p33
      %p35 = scmp.ne.s32.totalorder %s24, %s25
      %p36 = scmp.eq.s32.totalorder %s16, 0
      %p37 = por %p35, %p36
      %p38 = scmp.ne.s32.totalorder %s24, %s25
      %p39 = scmp.eq.s32.totalorder %s17, 2
      %p40 = por %p38, %p39
      %p42 = scmp.ne.s32.totalorder %s25, %s41
      %p43 = scmp.eq.s32.totalorder %s17, 0
      %p44 = por %p42, %p43
      %s46 = sadd.s32 %s45, 1
      %p49 = scmp.eq.s32.totalorder %s11, 2
      %p50 = scmp.ne.s32.totalorder %s45, %s47
      %p51 = scmp.eq.s32.totalorder %s11, 0
      %p52 = por %p50, %p51
      %p53 = scmp.ne.s32.totalorder %s45, %s47
      %p54 = scmp.eq.s32.totalorder %s16, 2
      %p55 = por %p53, %p54
      %p56 = scmp.ne.s32.totalorder %s47, %s48
      %p57 = scmp.eq.s32.totalorder %s16, 0
      %p58 = por %p56, %p57
      %p59 = scmp.ne.s32.totalorder %s47, %s48
      %p60 = scmp.eq.s32.totalorder %s17, 2
      %p61 = por %p59, %p60
      %p63 = scmp.ne.s32.totalorder %s48, %s62
      %p64 = scmp.eq.s32.totalorder %s17, 0
      %p65 = por %p63, %p64
      %s67 = sadd.s32 %s66, 1
      %p70 = scmp.eq.s32.totalorder %s11, 2
      %p71 = scmp.ne.s32.totalorder %s66, %s68
      %p72 = scmp.eq.s32.totalorder %s11, 0
      %p73 = por %p71, %p72
      %p74 = scmp.ne.s32.totalorder %s66, %s68
      %p75 = scmp.eq.s32.totalorder %s16, 2
      %p76 = por %p74, %p75
      %p77 = scmp.ne.s32.totalorder %s68, %s69
      %p78 = scmp.eq.s32.totalorder %s16, 0
      %p79 = por %p77, %p78
      %p80 = scmp.ne.s32.totalorder %s68, %s69
      %p81 = scmp.eq.s32.totalorder %s17, 2
      %p82 = por %p80, %p81
      %p84 = scmp.ne.s32.totalorder %s69, %s83
      %p85 = scmp.eq.s32.totalorder %s17, 0
      %p86 = por %p84, %p85
      %s88 = sadd.s32 %s87, 1
      %p91 = scmp.eq.s32.totalorder %s11, 2
      %p92 = scmp.ne.s32.totalorder %s87, %s89
      %p93 = scmp.eq.s32.totalorder %s11, 0
      %p94 = por %p92, %p93
      %p95 = scmp.ne.s32.totalorder %s87, %s89
      %p96 = scmp.eq.s32.totalorder %s16, 2
      %p97 = por %p95, %p96
      %p98 = scmp.ne.s32.totalorder %s89, %s90
      %p99 = scmp.eq.s32.totalorder %s16, 0
      %p100 = por %p98, %p99
      %p101 = scmp.ne.s32.totalorder %s89, %s90
      %p102 = scmp.eq.s32.totalorder %s17, 2
      %p103 = por %p101, %p102
      %p105 = scmp.ne.s32.totalorder %s90, %s104
      %p106 = scmp.eq.s32.totalorder %s17, 0
      %p107 = por %p105, %p106
      %s109 = sadd.s32 %s108, 1
      %p112 = scmp.eq.s32.totalorder %s11, 2
      %p113 = scmp.ne.s32.totalorder %s108, %s110
      %p114 = scmp.eq.s32.totalorder %s11, 0
      %p115 = por %p113, %p114
      %p116 = scmp.ne.s32.totalorder %s108, %s110
      %p117 = scmp.eq.s32.totalorder %s16, 2
      %p118 = por %p116, %p117
      %p119 = scmp.ne.s32.totalorder %s110, %s111
      %p120 = scmp.eq.s32.totalorder %s16, 0
      %p121 = por %p119, %p120
      %p122 = scmp.ne.s32.totalorder %s110, %s111
      %p123 = scmp.eq.s32.totalorder %s17, 2
      %p124 = por %p122, %p123
      %p126 = scmp.ne.s32.totalorder %s111, %s125
      %p127 = scmp.eq.s32.totalorder %s17, 0
      %p128 = por %p126, %p127
      %s129 = ssub.s32 %s11, %s18
      %p130 = scmp.eq.s32.totalorder %s129, 0
      %s132 = sadd.s32 %s131, 1
      %s133 = scalar_select %p130, %s131, %s132
      %p136 = pneg %p130
      %p137 = scmp.eq.s32.totalorder %s11, 2
      %p138 = por %p136, %p137
      %p139 = scmp.ne.s32.totalorder %s131, %s134
      %p140 = scmp.eq.s32.totalorder %s11, 0
      %p141 = por %p139, %p140
      %p142 = scmp.ne.s32.totalorder %s131, %s134
      %p143 = scmp.eq.s32.totalorder %s16, 2
      %p144 = por %p142, %p143
      %p145 = scmp.ne.s32.totalorder %s134, %s135
      %p146 = scmp.eq.s32.totalorder %s16, 0
      %p147 = por %p145, %p146
      %p148 = scmp.ne.s32.totalorder %s134, %s135
      %p149 = scmp.eq.s32.totalorder %s17, 2
      %p150 = por %p148, %p149
      %p152 = scmp.ne.s32.totalorder %s135, %s151
      %p153 = scmp.eq.s32.totalorder %s17, 0
      %p154 = por %p152, %p153
      %p155 = scmp.le.s32.totalorder 1, %s11
      %p156 = scmp.lt.s32.totalorder %s11, 4
      %p157 = pnand %p155, %p156
      %p158 = pneg %p157
      // Predicated region
      $region9: #{tpu_custom_call.1} parent=5 // pred_check
        _
      $region10: #{tpu_custom_call.1} parent=5 // pred_check_branch
        %160 = sbr.rel (%p157) target = $region12
      $region11: #{tpu_custom_call.1} parent=5 // pred_region
        %s161 = ssub.s32 %s11, 1
        // Predicated region
        $region13: #{tpu_custom_call.1} parent=11 // pred_check
          %p162 = pneg %p58
        $region14: #{tpu_custom_call.1} parent=11 // pred_check_branch
          %164 = sbr.rel (%p162) target = $region16
        $region15: #{tpu_custom_call.1} parent=11 // pred_region
          _
        $region16: #{tpu_custom_call.1} parent=11 // pred_fallthru
          _
        // Predicated region
        $region17: #{tpu_custom_call.1} parent=11 // pred_check
          %p165 = pneg %p79
        $region18: #{tpu_custom_call.1} parent=11 // pred_check_branch
          %167 = sbr.rel (%p165) target = $region20
        $region19: #{tpu_custom_call.1} parent=11 // pred_region
          _
        $region20: #{tpu_custom_call.1} parent=11 // pred_fallthru
          _
        // Predicated region
        $region21: #{tpu_custom_call.1} parent=11 // pred_check
          %p168 = pneg %p100
        $region22: #{tpu_custom_call.1} parent=11 // pred_check_branch
          %170 = sbr.rel (%p168) target = $region24
        $region23: #{tpu_custom_call.1} parent=11 // pred_region
          _
        $region24: #{tpu_custom_call.1} parent=11 // pred_fallthru
          _
        // Predicated region
        $region25: #{tpu_custom_call.1} parent=11 // pred_check
          %p171 = pneg %p121
        $region26: #{tpu_custom_call.1} parent=11 // pred_check_branch
          %173 = sbr.rel (%p171) target = $region28
        $region27: #{tpu_custom_call.1} parent=11 // pred_region
          _
        $region28: #{tpu_custom_call.1} parent=11 // pred_fallthru
          _
      $region12: #{tpu_custom_call.1} parent=5 // pred_fallthru
        _
      %p174 = scmp.lt.s32.totalorder %s11, 3
      // Predicated region
      $region29: #{tpu_custom_call.1} parent=5 // pred_check
        %p175 = pneg %p174
      $region30: #{tpu_custom_call.1} parent=5 // pred_check_branch
        %177 = sbr.rel (%p175) target = $region32
      $region31: #{tpu_custom_call.1} parent=5 // pred_region
        // Predicated region
        $region33: #{tpu_custom_call.1} parent=31 // pred_check
          %p178 = pneg %p31
        $region34: #{tpu_custom_call.1} parent=31 // pred_check_branch
          %180 = sbr.rel (%p178) target = $region36
        $region35: #{tpu_custom_call.1} parent=31 // pred_region
          %s181 = smul.u32 16, %s11
          %s182 = ssub.s32 38, %s181
          %p183 = scmp.lt.s32.totalorder %s182, 16
          %s184 = scalar_select %p183, %s182, 16
          %s185 = smul.u32 128, %s184
          %p186 = scmp.lt.s32.totalorder %s181, 37
          %s187 = scalar_select %p186, %s181, 37
          %s188 = smul.addr %s187, 8
          %s189 = scalar_lea.vmem %s0, %s188
          %s190 = smul.u32 16, %s11
          %s191 = ssub.s32 38, %s190
          %p192 = scmp.lt.s32.totalorder %s191, 16
          %s193 = scalar_select %p192, %s191, 16
          %s194 = smul.u32 128, %s193
        $region36: #{tpu_custom_call.1} parent=31 // pred_fallthru
          _
      $region32: #{tpu_custom_call.1} parent=5 // pred_fallthru
        _
      %p195 = scmp.le.s32.totalorder 1, %s11
      %p196 = scmp.lt.s32.totalorder %s11, 4
      %p197 = pnand %p195, %p196
      %p198 = pneg %p197
      // Predicated region
      $region37: #{tpu_custom_call.1} parent=5 // pred_check
        _
      $region38: #{tpu_custom_call.1} parent=5 // pred_check_branch
        %200 = sbr.rel (%p197) target = $region40
      $region39: #{tpu_custom_call.1} parent=5 // pred_region
        %s201 = ssub.s32 %s11, 1
        %s202 = smul.u32 16, %s16
        %s203 = ssub.s32 38, %s202
        %p204 = scmp.lt.s32.totalorder %s203, 16
        %s205 = scalar_select %p204, %s203, 16
        %s206 = smul.u32 128, %s205
        %p207 = scmp.lt.s32.totalorder %s202, 37
        %s208 = scalar_select %p207, %s202, 37
        %s209 = smul.addr %s208, 8
        %s210 = scalar_lea.vmem %s0, %s209
        %p211 = pneg %p37
        %p212 = pneg %p34
        %p213 = pneg %p58
        %p214 = pneg %p55
        %p215 = pneg %p79
        %p216 = pneg %p76
        %p217 = pneg %p100
        %p218 = pneg %p97
        %p219 = pneg %p121
        %p220 = pneg %p118
        %p221 = pneg %p147
        %p222 = pneg %p144
        %s223 = sand.u32 %s134, 1
        %s224 = sand.u32 %s134, 1
        %s225 = smul.addr %s224, 128
        %s226 = scalar_lea.vmem [#allocation2], %s225
        %s227 = smul.u32 16, %s16
        %s228 = ssub.s32 38, %s227
        %p229 = scmp.lt.s32.totalorder %s228, 16
        %s230 = scalar_select %p229, %s228, 16
        %s231 = smul.u32 128, %s230
        %p232 = scmp.lt.s32.totalorder %s227, 37
        %s233 = scalar_select %p232, %s227, 37
        %s234 = smul.addr %s233, 8
        %s235 = scalar_lea.vmem %s0, %s234
        %s236 = smul.u32 16, %s16
        %s237 = ssub.s32 38, %s236
        %p238 = scmp.lt.s32.totalorder %s237, 16
        %s239 = scalar_select %p238, %s237, 16
        %s240 = smul.u32 128, %s239
        %s241 = smul.u32 16, %s16
        %s242 = ssub.s32 38, %s241
        %p243 = scmp.lt.s32.totalorder %s242, 16
        %s244 = scalar_select %p243, %s242, 16
        %s245 = smul.u32 128, %s244
        %v246 = vld [vmem:[%s235] sm:$0xff]
        %v247 = vld [vmem:[%s235 + $0x8] sm:$0xff]
        %v248 = vld [vmem:[%s235 + $0x10] sm:$0xff]
        %v249 = vld [vmem:[%s235 + $0x18] sm:$0xff]
        %v250 = vld [vmem:[%s235 + $0x20] sm:$0xff]
        %v251 = vld [vmem:[%s235 + $0x28] sm:$0xff]
        %v252 = vld [vmem:[%s235 + $0x30] sm:$0xff]
        %v253 = vld [vmem:[%s235 + $0x38] sm:$0xff]
        %v254 = vld [vmem:[%s235 + $0x40] sm:$0xff]
        %v255 = vld [vmem:[%s235 + $0x48] sm:$0xff]
        %v256 = vld [vmem:[%s235 + $0x50] sm:$0xff]
        %v257 = vld [vmem:[%s235 + $0x58] sm:$0xff]
        %v258 = vld [vmem:[%s235 + $0x60] sm:$0xff]
        %v259 = vld [vmem:[%s235 + $0x68] sm:$0xff]
        %v260 = vld [vmem:[%s235 + $0x70] sm:$0xff]
        %v261 = vld [vmem:[%s235 + $0x78] sm:$0xff]
        %v262 = vld [vmem:[%s1] sm:$0xff]
        %v263 = vld [vmem:[%s1 + $0x8] sm:$0xff]
        %v264 = vld [vmem:[%s1 + $0x10] sm:$0xff]
        %v265 = vld [vmem:[%s1 + $0x18] sm:$0xff]
        %v266 = vld [vmem:[%s2] sm:$0x1]
        %v268 = vlaneseq
        %v269 = vshrl.u32 %v268, 7
        %v270 = vsub.s32 0, %v269
        %v271 = vrot.slane %v266, %v270
        %vm273 = vcmask 261120
        %v275 = vsel %vm273, %v246, 0
        %v278 = vsel %vm273, %v247, 0
        %v281 = vsel %vm273, %v248, 0
        %v284 = vsel %vm273, %v249, 0
        %v287 = vsel %vm273, %v250, 0
        %v290 = vsel %vm273, %v251, 0
        %v293 = vsel %vm273, %v252, 0
        %v296 = vsel %vm273, %v253, 0
        %v299 = vsel %vm273, %v254, 0
        %v302 = vsel %vm273, %v255, 0
        %v305 = vsel %vm273, %v256, 0
        %v308 = vsel %vm273, %v257, 0
        %v311 = vsel %vm273, %v258, 0
        %v314 = vsel %vm273, %v259, 0
        %v317 = vsel %vm273, %v260, 0
        %v320 = vsel %vm273, %v261, 0
        %322 = vmatprep.subr.mxu0 0.0
        %323 = vmatpush1.msra.mxu0 0.0
        %324 = vmatprep.subr.mxu0 0.0
        %325 = vmatpush1.msra.mxu0 0.0
        %326 = vmatprep.subr.mxu0 0.0
        %327 = vmatpush1.msra.mxu0 0.0
        %328 = vmatprep.subr.mxu0 0.0
        %329 = vmatpush1.msra.mxu0 0.0
        %330 = vmatprep.subr.mxu0 0.0
        %331 = vmatpush1.msra.mxu0 0.0
        %332 = vmatprep.subr.mxu0 0.0
        %333 = vmatpush1.msra.mxu0 0.0
        %334 = vmatprep.subr.mxu0 0.0
        %335 = vmatpush1.msra.mxu0 0.0
        %336 = vmatprep.subr.mxu0 0.0
        %337 = vmatpush1.msra.mxu0 0.0
        %338 = vmatprep.subr.mxu0 0.0
        %339 = vmatpush1.msra.mxu0 0.0
        %340 = vmatprep.subr.mxu0 0.0
        %341 = vmatpush1.msra.mxu0 0.0
        %342 = vmatprep.subr.mxu0 0.0
        %343 = vmatpush1.msra.mxu0 0.0
        %344 = vmatprep.subr.mxu0 0.0
        %345 = vmatpush1.msra.mxu0 0.0
        %346 = vmatprep.subr.mxu0 0.0
        %347 = vmatpush1.msra.mxu0 %v265
        %348 = vmatprep.subr.mxu0 0.0
        %349 = vmatpush1.msra.mxu0 %v264
        %350 = vmatprep.subr.mxu0 0.0
        %351 = vmatpush1.msra.mxu0 %v263
        %352 = vmatprep.subr.mxu0 0.0
        %353 = vmatpush1.msra.mxu0 %v262
        %354 = vmatprep.subr.mxu0 0.0
        %355 = vmatpush2.msra.mxu0 0.0
        %356 = vmatprep.subr.mxu0 0.0
        %357 = vmatpush2.msra.mxu0 0.0
        %358 = vmatprep.subr.mxu0 0.0
        %359 = vmatpush2.msra.mxu0 0.0
        %360 = vmatprep.subr.mxu0 0.0
        %361 = vmatpush2.msra.mxu0 0.0
        %362 = vmatprep.subr.mxu0 0.0
        %363 = vmatpush2.msra.mxu0 0.0
        %364 = vmatprep.subr.mxu0 0.0
        %365 = vmatpush2.msra.mxu0 0.0
        %366 = vmatprep.subr.mxu0 0.0
        %367 = vmatpush2.msra.mxu0 0.0
        %368 = vmatprep.subr.mxu0 0.0
        %369 = vmatpush2.msra.mxu0 0.0
        %370 = vmatprep.subr.mxu0 0.0
        %371 = vmatpush2.msra.mxu0 0.0
        %372 = vmatprep.subr.mxu0 0.0
        %373 = vmatpush2.msra.mxu0 0.0
        %374 = vmatprep.subr.mxu0 0.0
        %375 = vmatpush2.msra.mxu0 0.0
        %376 = vmatprep.subr.mxu0 0.0
        %377 = vmatpush2.msra.mxu0 0.0
        %378 = vmatprep.subr.mxu0 0.0
        %379 = vmatpush2.msra.mxu0 0.0
        %380 = vmatprep.subr.mxu0 0.0
        %381 = vmatpush2.msra.mxu0 0.0
        %382 = vmatprep.subr.mxu0 0.0
        %383 = vmatpush2.msra.mxu0 0.0
        %384 = vmatprep.subr.mxu0 0.0
        %385 = vmatpush2.msra.mxu0 0.0
        %386 = vmatprep.mubr.f32.mxu0 0.0
        %387 = vmatmul.mubr.f32.gmra.mxu0 %v275
        %v388 = vpop.f32.mrf.mxu0
        %v389 = vadd.f32 %v271, %v388
        %v390 = vpop.f32.mrf.mxu0
        %391 = vmatprep.mubr.f32.mxu0 0.0
        %392 = vmatmul.mubr.f32.gmra.mxu0 %v278
        %v393 = vpop.f32.mrf.mxu0
        %v394 = vadd.f32 %v271, %v393
        %v395 = vpop.f32.mrf.mxu0
        %396 = vmatprep.mubr.f32.mxu0 0.0
        %397 = vmatmul.mubr.f32.gmra.mxu0 %v281
        %v398 = vpop.f32.mrf.mxu0
        %v399 = vadd.f32 %v271, %v398
        %v400 = vpop.f32.mrf.mxu0
        %401 = vmatprep.mubr.f32.mxu0 0.0
        %402 = vmatmul.mubr.f32.gmra.mxu0 %v284
        %v403 = vpop.f32.mrf.mxu0
        %v404 = vadd.f32 %v271, %v403
        %v405 = vpop.f32.mrf.mxu0
        %406 = vmatprep.mubr.f32.mxu0 0.0
        %407 = vmatmul.mubr.f32.gmra.mxu0 %v287
        %v408 = vpop.f32.mrf.mxu0
        %v409 = vadd.f32 %v271, %v408
        %v410 = vpop.f32.mrf.mxu0
        %411 = vmatprep.mubr.f32.mxu0 0.0
        %412 = vmatmul.mubr.f32.gmra.mxu0 %v290
        %v413 = vpop.f32.mrf.mxu0
        %v414 = vadd.f32 %v271, %v413
        %v415 = vpop.f32.mrf.mxu0
        %416 = vmatprep.mubr.f32.mxu0 0.0
        %417 = vmatmul.mubr.f32.gmra.mxu0 %v293
        %v418 = vpop.f32.mrf.mxu0
        %v419 = vadd.f32 %v271, %v418
        %v420 = vpop.f32.mrf.mxu0
        %421 = vmatprep.mubr.f32.mxu0 0.0
        %422 = vmatmul.mubr.f32.gmra.mxu0 %v296
        %v423 = vpop.f32.mrf.mxu0
        %v424 = vadd.f32 %v271, %v423
        %v425 = vpop.f32.mrf.mxu0
        %426 = vmatprep.mubr.f32.mxu0 0.0
        %427 = vmatmul.mubr.f32.gmra.mxu0 %v299
        %v428 = vpop.f32.mrf.mxu0
        %v429 = vadd.f32 %v271, %v428
        %v430 = vpop.f32.mrf.mxu0
        %431 = vmatprep.mubr.f32.mxu0 0.0
        %432 = vmatmul.mubr.f32.gmra.mxu0 %v302
        %v433 = vpop.f32.mrf.mxu0
        %v434 = vadd.f32 %v271, %v433
        %v435 = vpop.f32.mrf.mxu0
        %436 = vmatprep.mubr.f32.mxu0 0.0
        %437 = vmatmul.mubr.f32.gmra.mxu0 %v305
        %v438 = vpop.f32.mrf.mxu0
        %v439 = vadd.f32 %v271, %v438
        %v440 = vpop.f32.mrf.mxu0
        %441 = vmatprep.mubr.f32.mxu0 0.0
        %442 = vmatmul.mubr.f32.gmra.mxu0 %v308
        %v443 = vpop.f32.mrf.mxu0
        %v444 = vadd.f32 %v271, %v443
        %v445 = vpop.f32.mrf.mxu0
        %446 = vmatprep.mubr.f32.mxu0 0.0
        %447 = vmatmul.mubr.f32.gmra.mxu0 %v311
        %v448 = vpop.f32.mrf.mxu0
        %v449 = vadd.f32 %v271, %v448
        %v450 = vpop.f32.mrf.mxu0
        %451 = vmatprep.mubr.f32.mxu0 0.0
        %452 = vmatmul.mubr.f32.gmra.mxu0 %v314
        %v453 = vpop.f32.mrf.mxu0
        %v454 = vadd.f32 %v271, %v453
        %v455 = vpop.f32.mrf.mxu0
        %456 = vmatprep.mubr.f32.mxu0 0.0
        %457 = vmatmul.mubr.f32.gmra.mxu0 %v317
        %v458 = vpop.f32.mrf.mxu0
        %v459 = vadd.f32 %v271, %v458
        %v460 = vpop.f32.mrf.mxu0
        %461 = vmatprep.mubr.f32.mxu0 0.0
        %462 = vmatmul.mubr.f32.gmra.mxu0 %v320
        %v463 = vpop.f32.mrf.mxu0
        %v464 = vadd.f32 %v271, %v463
        %v465 = vpop.f32.mrf.mxu0
        %466 = vdwg.mxu0
        %v467 = vmax.f32 %v389, 0.0
        %v468 = vmax.f32 %v394, 0.0
        %v469 = vmax.f32 %v399, 0.0
        %v470 = vmax.f32 %v404, 0.0
        %v471 = vmax.f32 %v409, 0.0
        %v472 = vmax.f32 %v414, 0.0
        %v473 = vmax.f32 %v419, 0.0
        %v474 = vmax.f32 %v424, 0.0
        %v475 = vmax.f32 %v429, 0.0
        %v476 = vmax.f32 %v434, 0.0
        %v477 = vmax.f32 %v439, 0.0
        %v478 = vmax.f32 %v444, 0.0
        %v479 = vmax.f32 %v449, 0.0
        %v480 = vmax.f32 %v454, 0.0
        %v481 = vmax.f32 %v459, 0.0
        %v482 = vmax.f32 %v464, 0.0
        %v483 = vld [vmem:[%s3] sm:$0xff]
        %v484 = vld [vmem:[%s4] sm:$0x1]
        %v486 = vlaneseq
        %v487 = vshrl.u32 %v486, 7
        %v488 = vsub.s32 0, %v487
        %v489 = vrot.slane %v484, %v488
        %vm491 = vcmask 64512
        %v493 = vsel %vm491, %v467, 0
        %v496 = vsel %vm491, %v468, 0
        %v499 = vsel %vm491, %v469, 0
        %v502 = vsel %vm491, %v470, 0
        %v505 = vsel %vm491, %v471, 0
        %v508 = vsel %vm491, %v472, 0
        %v511 = vsel %vm491, %v473, 0
        %v514 = vsel %vm491, %v474, 0
        %v517 = vsel %vm491, %v475, 0
        %v520 = vsel %vm491, %v476, 0
        %v523 = vsel %vm491, %v477, 0
        %v526 = vsel %vm491, %v478, 0
        %v529 = vsel %vm491, %v479, 0
        %v532 = vsel %vm491, %v480, 0
        %v535 = vsel %vm491, %v481, 0
        %v538 = vsel %vm491, %v482, 0
        %540 = vmatprep.subr.mxu0 0.0
        %541 = vmatpush1.msra.mxu0 0.0
        %542 = vmatprep.subr.mxu0 0.0
        %543 = vmatpush1.msra.mxu0 0.0
        %544 = vmatprep.subr.mxu0 0.0
        %545 = vmatpush1.msra.mxu0 0.0
        %546 = vmatprep.subr.mxu0 0.0
        %547 = vmatpush1.msra.mxu0 0.0
        %548 = vmatprep.subr.mxu0 0.0
        %549 = vmatpush1.msra.mxu0 0.0
        %550 = vmatprep.subr.mxu0 0.0
        %551 = vmatpush1.msra.mxu0 0.0
        %552 = vmatprep.subr.mxu0 0.0
        %553 = vmatpush1.msra.mxu0 0.0
        %554 = vmatprep.subr.mxu0 0.0
        %555 = vmatpush1.msra.mxu0 0.0
        %556 = vmatprep.subr.mxu0 0.0
        %557 = vmatpush1.msra.mxu0 0.0
        %558 = vmatprep.subr.mxu0 0.0
        %559 = vmatpush1.msra.mxu0 0.0
        %560 = vmatprep.subr.mxu0 0.0
        %561 = vmatpush1.msra.mxu0 0.0
        %562 = vmatprep.subr.mxu0 0.0
        %563 = vmatpush1.msra.mxu0 0.0
        %564 = vmatprep.subr.mxu0 0.0
        %565 = vmatpush1.msra.mxu0 0.0
        %566 = vmatprep.subr.mxu0 0.0
        %567 = vmatpush1.msra.mxu0 0.0
        %568 = vmatprep.subr.mxu0 0.0
        %569 = vmatpush1.msra.mxu0 0.0
        %570 = vmatprep.subr.mxu0 0.0
        %571 = vmatpush1.msra.mxu0 %v483
        %572 = vmatprep.subr.mxu0 0.0
        %573 = vmatpush2.msra.mxu0 0.0
        %574 = vmatprep.subr.mxu0 0.0
        %575 = vmatpush2.msra.mxu0 0.0
        %576 = vmatprep.subr.mxu0 0.0
        %577 = vmatpush2.msra.mxu0 0.0
        %578 = vmatprep.subr.mxu0 0.0
        %579 = vmatpush2.msra.mxu0 0.0
        %580 = vmatprep.subr.mxu0 0.0
        %581 = vmatpush2.msra.mxu0 0.0
        %582 = vmatprep.subr.mxu0 0.0
        %583 = vmatpush2.msra.mxu0 0.0
        %584 = vmatprep.subr.mxu0 0.0
        %585 = vmatpush2.msra.mxu0 0.0
        %586 = vmatprep.subr.mxu0 0.0
        %587 = vmatpush2.msra.mxu0 0.0
        %588 = vmatprep.subr.mxu0 0.0
        %589 = vmatpush2.msra.mxu0 0.0
        %590 = vmatprep.subr.mxu0 0.0
        %591 = vmatpush2.msra.mxu0 0.0
        %592 = vmatprep.subr.mxu0 0.0
        %593 = vmatpush2.msra.mxu0 0.0
        %594 = vmatprep.subr.mxu0 0.0
        %595 = vmatpush2.msra.mxu0 0.0
        %596 = vmatprep.subr.mxu0 0.0
        %597 = vmatpush2.msra.mxu0 0.0
        %598 = vmatprep.subr.mxu0 0.0
        %599 = vmatpush2.msra.mxu0 0.0
        %600 = vmatprep.subr.mxu0 0.0
        %601 = vmatpush2.msra.mxu0 0.0
        %602 = vmatprep.subr.mxu0 0.0
        %603 = vmatpush2.msra.mxu0 0.0
        %604 = vmatprep.mubr.f32.mxu0 0.0
        %605 = vmatmul.mubr.f32.gmra.mxu0 %v493
        %v606 = vpop.f32.mrf.mxu0
        %v607 = vadd.f32 %v489, %v606
        %v608 = vpop.f32.mrf.mxu0
        %609 = vmatprep.mubr.f32.mxu0 0.0
        %610 = vmatmul.mubr.f32.gmra.mxu0 %v496
        %v611 = vpop.f32.mrf.mxu0
        %v612 = vadd.f32 %v489, %v611
        %v613 = vpop.f32.mrf.mxu0
        %614 = vmatprep.mubr.f32.mxu0 0.0
        %615 = vmatmul.mubr.f32.gmra.mxu0 %v499
        %v616 = vpop.f32.mrf.mxu0
        %v617 = vadd.f32 %v489, %v616
        %v618 = vpop.f32.mrf.mxu0
        %619 = vmatprep.mubr.f32.mxu0 0.0
        %620 = vmatmul.mubr.f32.gmra.mxu0 %v502
        %v621 = vpop.f32.mrf.mxu0
        %v622 = vadd.f32 %v489, %v621
        %v623 = vpop.f32.mrf.mxu0
        %624 = vmatprep.mubr.f32.mxu0 0.0
        %625 = vmatmul.mubr.f32.gmra.mxu0 %v505
        %v626 = vpop.f32.mrf.mxu0
        %v627 = vadd.f32 %v489, %v626
        %v628 = vpop.f32.mrf.mxu0
        %629 = vmatprep.mubr.f32.mxu0 0.0
        %630 = vmatmul.mubr.f32.gmra.mxu0 %v508
        %v631 = vpop.f32.mrf.mxu0
        %v632 = vadd.f32 %v489, %v631
        %v633 = vpop.f32.mrf.mxu0
        %634 = vmatprep.mubr.f32.mxu0 0.0
        %635 = vmatmul.mubr.f32.gmra.mxu0 %v511
        %v636 = vpop.f32.mrf.mxu0
        %v637 = vadd.f32 %v489, %v636
        %v638 = vpop.f32.mrf.mxu0
        %639 = vmatprep.mubr.f32.mxu0 0.0
        %640 = vmatmul.mubr.f32.gmra.mxu0 %v514
        %v641 = vpop.f32.mrf.mxu0
        %v642 = vadd.f32 %v489, %v641
        %v643 = vpop.f32.mrf.mxu0
        %644 = vmatprep.mubr.f32.mxu0 0.0
        %645 = vmatmul.mubr.f32.gmra.mxu0 %v517
        %v646 = vpop.f32.mrf.mxu0
        %v647 = vadd.f32 %v489, %v646
        %v648 = vpop.f32.mrf.mxu0
        %649 = vmatprep.mubr.f32.mxu0 0.0
        %650 = vmatmul.mubr.f32.gmra.mxu0 %v520
        %v651 = vpop.f32.mrf.mxu0
        %v652 = vadd.f32 %v489, %v651
        %v653 = vpop.f32.mrf.mxu0
        %654 = vmatprep.mubr.f32.mxu0 0.0
        %655 = vmatmul.mubr.f32.gmra.mxu0 %v523
        %v656 = vpop.f32.mrf.mxu0
        %v657 = vadd.f32 %v489, %v656
        %v658 = vpop.f32.mrf.mxu0
        %659 = vmatprep.mubr.f32.mxu0 0.0
        %660 = vmatmul.mubr.f32.gmra.mxu0 %v526
        %v661 = vpop.f32.mrf.mxu0
        %v662 = vadd.f32 %v489, %v661
        %v663 = vpop.f32.mrf.mxu0
        %664 = vmatprep.mubr.f32.mxu0 0.0
        %665 = vmatmul.mubr.f32.gmra.mxu0 %v529
        %v666 = vpop.f32.mrf.mxu0
        %v667 = vadd.f32 %v489, %v666
        %v668 = vpop.f32.mrf.mxu0
        %669 = vmatprep.mubr.f32.mxu0 0.0
        %670 = vmatmul.mubr.f32.gmra.mxu0 %v532
        %v671 = vpop.f32.mrf.mxu0
        %v672 = vadd.f32 %v489, %v671
        %v673 = vpop.f32.mrf.mxu0
        %674 = vmatprep.mubr.f32.mxu0 0.0
        %675 = vmatmul.mubr.f32.gmra.mxu0 %v535
        %v676 = vpop.f32.mrf.mxu0
        %v677 = vadd.f32 %v489, %v676
        %v678 = vpop.f32.mrf.mxu0
        %679 = vmatprep.mubr.f32.mxu0 0.0
        %680 = vmatmul.mubr.f32.gmra.mxu0 %v538
        %v681 = vpop.f32.mrf.mxu0
        %v682 = vadd.f32 %v489, %v681
        %v683 = vpop.f32.mrf.mxu0
        %684 = vdwg.mxu0
        %vm685 = vcmask 15360
        %686 = vst.msk [vmem:[%s226] sm:$0xff] %vm685, %v607
        %687 = vst.msk [vmem:[%s226 + $0x8] sm:$0xff] %vm685, %v612
        %688 = vst.msk [vmem:[%s226 + $0x10] sm:$0xff] %vm685, %v617
        %689 = vst.msk [vmem:[%s226 + $0x18] sm:$0xff] %vm685, %v622
        %690 = vst.msk [vmem:[%s226 + $0x20] sm:$0xff] %vm685, %v627
        %691 = vst.msk [vmem:[%s226 + $0x28] sm:$0xff] %vm685, %v632
        %692 = vst.msk [vmem:[%s226 + $0x30] sm:$0xff] %vm685, %v637
        %693 = vst.msk [vmem:[%s226 + $0x38] sm:$0xff] %vm685, %v642
        %694 = vst.msk [vmem:[%s226 + $0x40] sm:$0xff] %vm685, %v647
        %695 = vst.msk [vmem:[%s226 + $0x48] sm:$0xff] %vm685, %v652
        %696 = vst.msk [vmem:[%s226 + $0x50] sm:$0xff] %vm685, %v657
        %697 = vst.msk [vmem:[%s226 + $0x58] sm:$0xff] %vm685, %v662
        %698 = vst.msk [vmem:[%s226 + $0x60] sm:$0xff] %vm685, %v667
        %699 = vst.msk [vmem:[%s226 + $0x68] sm:$0xff] %vm685, %v672
        %700 = vst.msk [vmem:[%s226 + $0x70] sm:$0xff] %vm685, %v677
        %701 = vst.msk [vmem:[%s226 + $0x78] sm:$0xff] %vm685, %v682
        %s702 = sand.u32 %s134, 1
        %s703 = sand.u32 %s134, 1
        %s704 = smul.addr %s703, 128
        %s705 = scalar_lea.vmem [#allocation2], %s704
        // Predicated region
        $region41: #{tpu_custom_call.1} parent=39 // pred_check
          %p706 = pneg %p144
        $region42: #{tpu_custom_call.1} parent=39 // pred_check_branch
          %708 = sbr.rel (%p706) target = $region44
        $region43: #{tpu_custom_call.1} parent=39 // pred_region
          %s709 = smul.u32 16, %s16
          %s710 = ssub.s32 38, %s709
          %p711 = scmp.lt.s32.totalorder %s710, 16
          %s712 = scalar_select %p711, %s710, 16
          %s713 = smul.u32 128, %s712
          %p714 = scmp.ne.s32.totalorder 0, %s713
          %s715 = smul.addr %s709, 8
          %s716 = scalar_lea.vmem %s5, %s715
          // Predicated region
          $region45: #{tpu_custom_call.1} parent=43 // pred_check
            %p717 = pneg %p714
          $region46: #{tpu_custom_call.1} parent=43 // pred_check_branch
            %719 = sbr.rel (%p717) target = $region48
          $region47: #{tpu_custom_call.1} parent=43 // pred_region
            // Predicated region
            $region49: #{tpu_custom_call.1} parent=47 // pred_check
              _
            $region50: #{tpu_custom_call.1} parent=47 // pred_check_branch
              %721 = sbr.rel (0) target = $region52
            $region51: #{tpu_custom_call.1} parent=47 // pred_region
              // Predicated region
              $region71: #{tpu_custom_call.1} parent=51 // pred_check
                _
              $region72: #{tpu_custom_call.1} parent=51 // pred_check_branch
                %801 = sbr.rel (0) target = $region74
              $region73: #{tpu_custom_call.1} parent=51 // pred_region
                %s802 = sshrl.u32 %s712, 4
                // While loop
                $region75: #{tpu_custom_call.1} parent=73 // loop_pre_header
                  _
                $region76: #{tpu_custom_call.1} parent=73 // loop_header
                  %s804 = sphi 0, %s806
                  %p805 = scmp.ge.s32.totalorder %s804, %s802
                  %s809 = sphi 0, %s846
                  %s810 = sphi %s705, %s849
                  %s811 = sphi %s716, %s850
                $region77: #{tpu_custom_call.1} parent=73 // loop_header_branch
                  %808 = sbr.rel (%p805) target = $region81
                $region78: #{tpu_custom_call.1} parent=73 // loop_body
                  %v812 = vld [vmem:[%s810] sm:$0xff]
                  %813 = vst [vmem:[%s811] sm:$0xff] %v812
                  %v814 = vld [vmem:[%s810 + $0x8] sm:$0xff]
                  %815 = vst [vmem:[%s811 + $0x8] sm:$0xff] %v814
                  %v816 = vld [vmem:[%s810 + $0x10] sm:$0xff]
                  %817 = vst [vmem:[%s811 + $0x10] sm:$0xff] %v816
                  %v818 = vld [vmem:[%s810 + $0x18] sm:$0xff]
                  %819 = vst [vmem:[%s811 + $0x18] sm:$0xff] %v818
                  %v820 = vld [vmem:[%s810 + $0x20] sm:$0xff]
                  %821 = vst [vmem:[%s811 + $0x20] sm:$0xff] %v820
                  %v822 = vld [vmem:[%s810 + $0x28] sm:$0xff]
                  %823 = vst [vmem:[%s811 + $0x28] sm:$0xff] %v822
                  %v824 = vld [vmem:[%s810 + $0x30] sm:$0xff]
                  %825 = vst [vmem:[%s811 + $0x30] sm:$0xff] %v824
                  %v826 = vld [vmem:[%s810 + $0x38] sm:$0xff]
                  %827 = vst [vmem:[%s811 + $0x38] sm:$0xff] %v826
                  %v828 = vld [vmem:[%s810 + $0x40] sm:$0xff]
                  %829 = vst [vmem:[%s811 + $0x40] sm:$0xff] %v828
                  %v830 = vld [vmem:[%s810 + $0x48] sm:$0xff]
                  %831 = vst [vmem:[%s811 + $0x48] sm:$0xff] %v830
                  %v832 = vld [vmem:[%s810 + $0x50] sm:$0xff]
                  %833 = vst [vmem:[%s811 + $0x50] sm:$0xff] %v832
                  %v834 = vld [vmem:[%s810 + $0x58] sm:$0xff]
                  %835 = vst [vmem:[%s811 + $0x58] sm:$0xff] %v834
                  %v836 = vld [vmem:[%s810 + $0x60] sm:$0xff]
                  %837 = vst [vmem:[%s811 + $0x60] sm:$0xff] %v836
                  %v838 = vld [vmem:[%s810 + $0x68] sm:$0xff]
                  %839 = vst [vmem:[%s811 + $0x68] sm:$0xff] %v838
                  %v840 = vld [vmem:[%s810 + $0x70] sm:$0xff]
                  %841 = vst [vmem:[%s811 + $0x70] sm:$0xff] %v840
                  %v842 = vld [vmem:[%s810 + $0x78] sm:$0xff]
                  %843 = vst [vmem:[%s811 + $0x78] sm:$0xff] %v842
                  %s844 = sadd.s32 1, %s809
                  %p845 = scmp.ge.s32.totalorder %s844, %s802
                  %s846 = scalar_select %p845, 0, %s844
                  %s847 = smul.u32 %s846, 128
                  %s848 = smul.u32 %s846, 128
                  %s849 = scalar_lea.vmem %s705, %s847 [#allocation2]
                  %s850 = scalar_lea.vmem %s716, %s848
                $region79: #{tpu_custom_call.1} parent=73 // loop_footer
                  %s806 = sadd.s32 %s804, 1
                $region80: #{tpu_custom_call.1} parent=73 // loop_footer_branch
                  %803 = sbr.rel target = $region76
                $region81: #{tpu_custom_call.1} parent=73 // loop_exit
                  _
                %s851 = sshrl.u32 %s712, 4
                %s852 = sand.u32 %s712, 15
                %s853 = smul.u32 %s851, 16
                %s854 = smul.u32 8, %s853
                %s855 = scalar_lea.vmem %s705, %s854 [#allocation2]
                %s856 = smul.u32 8, %s853
                %s857 = scalar_lea.vmem %s716, %s856
                // While loop
                $region82: #{tpu_custom_call.1} parent=73 // loop_pre_header
                  _
                $region83: #{tpu_custom_call.1} parent=73 // loop_header
                  %s859 = sphi 0, %s861
                  %p860 = scmp.ge.s32.totalorder %s859, %s852
                  %s864 = sphi 0, %s871
                  %s865 = sphi %s855, %s874
                  %s866 = sphi %s857, %s875
                $region84: #{tpu_custom_call.1} parent=73 // loop_header_branch
                  %863 = sbr.rel (%p860) target = $region88
                $region85: #{tpu_custom_call.1} parent=73 // loop_body
                  %v867 = vld [vmem:[%s865] sm:$0xff]
                  %868 = vst [vmem:[%s866] sm:$0xff] %v867
                  %s869 = sadd.s32 1, %s864
                  %p870 = scmp.ge.s32.totalorder %s869, %s852
                  %s871 = scalar_select %p870, 0, %s869
                  %s872 = smul.u32 %s871, 8
                  %s873 = smul.u32 %s871, 8
                  %s874 = scalar_lea.vmem %s855, %s872 [#allocation2]
                  %s875 = scalar_lea.vmem %s857, %s873
                $region86: #{tpu_custom_call.1} parent=73 // loop_footer
                  %s861 = sadd.s32 %s859, 1
                $region87: #{tpu_custom_call.1} parent=73 // loop_footer_branch
                  %858 = sbr.rel target = $region83
                $region88: #{tpu_custom_call.1} parent=73 // loop_exit
                  _
              $region74: #{tpu_custom_call.1} parent=51 // pred_fallthru
                _
              // Predicated region
              $region89: #{tpu_custom_call.1} parent=51 // pred_check
                _
              $region90: #{tpu_custom_call.1} parent=51 // pred_check_branch
                %877 = sbr.rel target = $region92
              $region91: #{tpu_custom_call.1} parent=51 // pred_region
                _
              $region92: #{tpu_custom_call.1} parent=51 // pred_fallthru
                _
            $region52: #{tpu_custom_call.1} parent=47 // pred_fallthru
              _
            // Predicated region
            $region53: #{tpu_custom_call.1} parent=47 // pred_check
              _
            $region54: #{tpu_custom_call.1} parent=47 // pred_check_branch
              %723 = sbr.rel target = $region56
            $region55: #{tpu_custom_call.1} parent=47 // pred_region
              %s725 = ssub.s32 256, 1
              %s726 = sshrl.u32 %s712, 4
              // While loop
              $region57: #{tpu_custom_call.1} parent=55 // loop_pre_header
                _
              $region58: #{tpu_custom_call.1} parent=55 // loop_header
                %s728 = sphi 0, %s730
                %p729 = scmp.ge.s32.totalorder %s728, %s726
                %s733 = sphi 0, %s770
                %s734 = sphi %s705, %s773
                %s735 = sphi %s716, %s774
              $region59: #{tpu_custom_call.1} parent=55 // loop_header_branch
                %732 = sbr.rel (%p729) target = $region63
              $region60: #{tpu_custom_call.1} parent=55 // loop_body
                %v736 = vld [vmem:[%s734] sm:%s725]
                %737 = vst [vmem:[%s735] sm:%s725] %v736
                %v738 = vld [vmem:[%s734 + $0x8] sm:%s725]
                %739 = vst [vmem:[%s735 + $0x8] sm:%s725] %v738
                %v740 = vld [vmem:[%s734 + $0x10] sm:%s725]
                %741 = vst [vmem:[%s735 + $0x10] sm:%s725] %v740
                %v742 = vld [vmem:[%s734 + $0x18] sm:%s725]
                %743 = vst [vmem:[%s735 + $0x18] sm:%s725] %v742
                %v744 = vld [vmem:[%s734 + $0x20] sm:%s725]
                %745 = vst [vmem:[%s735 + $0x20] sm:%s725] %v744
                %v746 = vld [vmem:[%s734 + $0x28] sm:%s725]
                %747 = vst [vmem:[%s735 + $0x28] sm:%s725] %v746
                %v748 = vld [vmem:[%s734 + $0x30] sm:%s725]
                %749 = vst [vmem:[%s735 + $0x30] sm:%s725] %v748
                %v750 = vld [vmem:[%s734 + $0x38] sm:%s725]
                %751 = vst [vmem:[%s735 + $0x38] sm:%s725] %v750
                %v752 = vld [vmem:[%s734 + $0x40] sm:%s725]
                %753 = vst [vmem:[%s735 + $0x40] sm:%s725] %v752
                %v754 = vld [vmem:[%s734 + $0x48] sm:%s725]
                %755 = vst [vmem:[%s735 + $0x48] sm:%s725] %v754
                %v756 = vld [vmem:[%s734 + $0x50] sm:%s725]
                %757 = vst [vmem:[%s735 + $0x50] sm:%s725] %v756
                %v758 = vld [vmem:[%s734 + $0x58] sm:%s725]
                %759 = vst [vmem:[%s735 + $0x58] sm:%s725] %v758
                %v760 = vld [vmem:[%s734 + $0x60] sm:%s725]
                %761 = vst [vmem:[%s735 + $0x60] sm:%s725] %v760
                %v762 = vld [vmem:[%s734 + $0x68] sm:%s725]
                %763 = vst [vmem:[%s735 + $0x68] sm:%s725] %v762
                %v764 = vld [vmem:[%s734 + $0x70] sm:%s725]
                %765 = vst [vmem:[%s735 + $0x70] sm:%s725] %v764
                %v766 = vld [vmem:[%s734 + $0x78] sm:%s725]
                %767 = vst [vmem:[%s735 + $0x78] sm:%s725] %v766
                %s768 = sadd.s32 1, %s733
                %p769 = scmp.ge.s32.totalorder %s768, %s726
                %s770 = scalar_select %p769, 0, %s768
                %s771 = smul.u32 %s770, 128
                %s772 = smul.u32 %s770, 128
                %s773 = scalar_lea.vmem %s705, %s771 [#allocation2]
                %s774 = scalar_lea.vmem %s716, %s772
              $region61: #{tpu_custom_call.1} parent=55 // loop_footer
                %s730 = sadd.s32 %s728, 1
              $region62: #{tpu_custom_call.1} parent=55 // loop_footer_branch
                %727 = sbr.rel target = $region58
              $region63: #{tpu_custom_call.1} parent=55 // loop_exit
                _
              %s775 = sshrl.u32 %s712, 4
              %s776 = sand.u32 %s712, 15
              %s777 = smul.u32 %s775, 16
              %s778 = smul.u32 8, %s777
              %s779 = scalar_lea.vmem %s705, %s778 [#allocation2]
              %s780 = smul.u32 8, %s777
              %s781 = scalar_lea.vmem %s716, %s780
              // While loop
              $region64: #{tpu_custom_call.1} parent=55 // loop_pre_header
                _
              $region65: #{tpu_custom_call.1} parent=55 // loop_header
                %s783 = sphi 0, %s785
                %p784 = scmp.ge.s32.totalorder %s783, %s776
                %s788 = sphi 0, %s795
                %s789 = sphi %s779, %s798
                %s790 = sphi %s781, %s799
              $region66: #{tpu_custom_call.1} parent=55 // loop_header_branch
                %787 = sbr.rel (%p784) target = $region70
              $region67: #{tpu_custom_call.1} parent=55 // loop_body
                %v791 = vld [vmem:[%s789] sm:%s725]
                %792 = vst [vmem:[%s790] sm:%s725] %v791
                %s793 = sadd.s32 1, %s788
                %p794 = scmp.ge.s32.totalorder %s793, %s776
                %s795 = scalar_select %p794, 0, %s793
                %s796 = smul.u32 %s795, 8
                %s797 = smul.u32 %s795, 8
                %s798 = scalar_lea.vmem %s779, %s796 [#allocation2]
                %s799 = scalar_lea.vmem %s781, %s797
              $region68: #{tpu_custom_call.1} parent=55 // loop_footer
                %s785 = sadd.s32 %s783, 1
              $region69: #{tpu_custom_call.1} parent=55 // loop_footer_branch
                %782 = sbr.rel target = $region65
              $region70: #{tpu_custom_call.1} parent=55 // loop_exit
                _
            $region56: #{tpu_custom_call.1} parent=47 // pred_fallthru
              _
          $region48: #{tpu_custom_call.1} parent=43 // pred_fallthru
            _
          %878 = vnop
        $region44: #{tpu_custom_call.1} parent=39 // pred_fallthru
          _
      $region40: #{tpu_custom_call.1} parent=5 // pred_fallthru
        _
      %p879 = scmp.le.s32.totalorder 2, %s11
      // Predicated region
      $region93: #{tpu_custom_call.1} parent=5 // pred_check
        %p880 = pneg %p879
      $region94: #{tpu_custom_call.1} parent=5 // pred_check_branch
        %882 = sbr.rel (%p880) target = $region96
      $region95: #{tpu_custom_call.1} parent=5 // pred_region
        %s883 = ssub.s32 %s11, 2
        // Predicated region
        $region97: #{tpu_custom_call.1} parent=95 // pred_check
          %p884 = pneg %p150
        $region98: #{tpu_custom_call.1} parent=95 // pred_check_branch
          %886 = sbr.rel (%p884) target = $region100
        $region99: #{tpu_custom_call.1} parent=95 // pred_region
          %s887 = sand.u32 %s135, 1
          %s888 = sand.u32 %s135, 1
          %s889 = smul.addr %s888, 128
          %s890 = scalar_lea.vmem [#allocation2], %s889
        $region100: #{tpu_custom_call.1} parent=95 // pred_fallthru
          _
      $region96: #{tpu_custom_call.1} parent=5 // pred_fallthru
        _
    $region6: #{tpu_custom_call.1} parent=1 // loop_footer
      %s15 = sadd.s32 1, %s11
    $region7: #{tpu_custom_call.1} parent=1 // loop_footer_branch
      %10 = sbr.rel target = $region3
    $region8: #{tpu_custom_call.1} parent=1 // loop_exit
      _

</llo_original>
